<compile_context>
chip_gen: v5e
topology: v5e:2x2
jax: 0.10.0
libtpu: 0.0.40
codegen_flags: <defaults>
</compile_context>

<pallas_src>
import functools

import jax
import jax.numpy as jnp
from jax import lax
from jax.experimental import pallas as pl
from jax.experimental.pallas import tpu as pltpu


def _round_up(x, m):
    return (x + m - 1) // m * m


def _text_clf_kernel(ids_ref, emb_ref, w_ref, b_ref, out_ref, acc_ref, *, t_len):
    # ids_ref : (B_pad*T,) int32 SMEM (scalar prefetch, flattened -> compact SMEM)
    # emb_ref : (V_pad, D_pad) f32 VMEM (resident)
    # w_ref   : (D_pad, C_pad) f32 VMEM (resident)
    # b_ref   : (1, C_pad)     f32 VMEM (resident)
    # out_ref : (B_TILE, C_pad) f32
    # acc_ref : (B_TILE, D_pad) f32 scratch (bag means for this batch tile)
    i = pl.program_id(0)                       # batch-tile index
    b_tile, d_pad = acc_ref.shape
    inv_t = 1.0 / t_len                        # EmbeddingBag mean over bag length T

    # Per-row gather + mean.  The live state per row is a single (1, D_pad) f32
    # vreg-sized accumulator (no large spilled intermediates).
    @pl.loop(0, b_tile)
    def _(r):
        row0 = (i * b_tile + r) * t_len

        def tok_body(t, row_acc):
            idx = ids_ref[row0 + t]                       # SMEM scalar read
            return row_acc + emb_ref[pl.ds(idx, 1), :]    # dynamic row gather (f32)

        row_sum = lax.fori_loop(0, t_len, tok_body,
                                jnp.zeros((1, d_pad), jnp.float32),
                                unroll=True)
        acc_ref[pl.ds(r, 1), :] = row_sum * inv_t

    # Fused Linear: one lane-dense matmul + bias for the whole batch tile.
    logits = jnp.dot(acc_ref[...], w_ref[...],
                     preferred_element_type=jnp.float32) + b_ref[...]
    out_ref[...] = logits.astype(out_ref.dtype)


def text_classification_forward(text, emb_table, fc_w, fc_b):
    """text: (B, T) int; emb_table: (V, D) f32; fc_w: (D, C) f32; fc_b: (1, C) f32."""
    B, T = text.shape
    V, D = emb_table.shape
    C = fc_w.shape[1]

    LANE = 128
    SUB = 8
    D_pad = _round_up(D, LANE)
    C_pad = _round_up(C, LANE)
    V_pad = _round_up(V, SUB)

    # Batch tile: >= 2 tiles whenever B >= 16 so the "parallel" grid axis can
    # shard across v7x's two TensorCores; capped at 256 rows (v6e/v7x MXU M).
    if B >= 16:
        B_TILE = min(256, _round_up(pl.cdiv(B, 2), SUB))
    else:
        B_TILE = _round_up(B, SUB)
    B_pad = _round_up(B, B_TILE)

    # Zero padding is mathematically inert: padded D/C columns are zero in the
    # table / weight / bias, padded batch rows are sliced off, padded vocab
    # rows are never indexed (all ids < V).
    text_p = jnp.pad(text.astype(jnp.int32), ((0, B_pad - B), (0, 0)))
    ids_flat = text_p.reshape(-1)                       # 1-D => compact SMEM footprint
    emb_p = jnp.pad(emb_table, ((0, V_pad - V), (0, D_pad - D)))
    w_p = jnp.pad(fc_w, ((0, D_pad - D), (0, C_pad - C)))
    b_p = jnp.pad(fc_b, ((0, 0), (0, C_pad - C)))

    grid = (B_pad // B_TILE,)

    out = pl.pallas_call(
        functools.partial(_text_clf_kernel, t_len=T),
        out_shape=jax.ShapeDtypeStruct((B_pad, C_pad), jnp.float32),
        grid_spec=pltpu.PrefetchScalarGridSpec(
            num_scalar_prefetch=1,                       # ids -> SMEM
            grid=grid,
            in_specs=[
                pl.BlockSpec((V_pad, D_pad), lambda i, ids: (0, 0)),  # emb table (resident)
                pl.BlockSpec((D_pad, C_pad), lambda i, ids: (0, 0)),  # fc weight (resident)
                pl.BlockSpec((1, C_pad), lambda i, ids: (0, 0)),      # fc bias   (resident)
            ],
            out_specs=pl.BlockSpec((B_TILE, C_pad), lambda i, ids: (i, 0)),
            scratch_shapes=[pltpu.VMEM((B_TILE, D_pad), jnp.float32)],  # bag means
        ),
        compiler_params=pltpu.CompilerParams(
            dimension_semantics=("parallel",),           # batch tiles across TCs
            vmem_limit_bytes=32 * 1024 * 1024,
        ),
    )(ids_flat, emb_p, w_p, b_p)

    return out[:B, :C]


if __name__ == "__main__":
    # Small, deterministic problem consistent with the module's forward.
    VOCAB_SIZE = 64
    EMBED_DIM = 32
    NUM_CLASS = 8
    BATCH = 8
    SEQ = 16

    key = jax.random.PRNGKey(0)
    k_text, k_emb, k_w, k_b = jax.random.split(key, 4)

    text = jax.random.randint(k_text, (BATCH, SEQ), 0, VOCAB_SIZE, dtype=jnp.int32)
    emb_table = jax.random.normal(k_emb, (VOCAB_SIZE, EMBED_DIM), dtype=jnp.float32)
    # PyTorch Linear weight is (NUM_CLASS, EMBED_DIM); kernel takes its transpose.
    fc_w_t = jax.random.uniform(k_w, (EMBED_DIM, NUM_CLASS), dtype=jnp.float32,
                                minval=-0.1, maxval=0.1)
    fc_b = jax.random.uniform(k_b, (1, NUM_CLASS), dtype=jnp.float32,
                              minval=-0.1, maxval=0.1)

    out = text_classification_forward(text, emb_table, fc_w_t, fc_b)
    out = jax.block_until_ready(out)

    # Pure-JAX f32 reference: EmbeddingBag(mean) + Linear (no quantization).
    ref = emb_table[text].mean(axis=1) @ fc_w_t + fc_b

    assert out.shape == (BATCH, NUM_CLASS)
    # Tolerance covers f32-matmul precision-path differences between the MXU
    # kernel matmul and XLA's default-precision reference matmul.
    assert jnp.allclose(out, ref, atol=1e-3, rtol=1e-3), float(jnp.max(jnp.abs(out - ref)))

    print("KERNEL_OK")
</pallas_src>

<mosaic_0001>
module attributes {stable_mosaic.version = 11 : i64} {
  func.func @_text_clf_kernel(%arg0: i32, %arg1: memref<128xi32, #tpu.memory_space<smem>>, %arg2: memref<64x128xf32, #tpu.memory_space<vmem>>, %arg3: memref<128x128xf32, #tpu.memory_space<vmem>>, %arg4: memref<1x128xf32, #tpu.memory_space<vmem>>, %arg5: memref<8x128xf32, #tpu.memory_space<vmem>>, %arg6: memref<8x128xf32, #tpu.memory_space<vmem>>) attributes {dimension_semantics = [#tpu.dimension_semantics<parallel>], iteration_bounds = array<i64: 1>, scalar_prefetch = 1 : i64, scratch_operands = 1 : i64, tpu.core_type = #tpu.core_type<tc>, window_params = [{pipeline_mode = #tpu.pipeline_mode<synchronous>, transform_indices = @transform_0, window_bounds = array<i64: 64, 128>}, {pipeline_mode = #tpu.pipeline_mode<synchronous>, transform_indices = @transform_1, window_bounds = array<i64: 128, 128>}, {pipeline_mode = #tpu.pipeline_mode<synchronous>, transform_indices = @transform_2, window_bounds = array<i64: 1, 128>}, {transform_indices = @transform_3, window_bounds = array<i64: 8, 128>}]} {
    %c0_i32 = arith.constant 0 : i32
    %c8_i32 = arith.constant 8 : i32
    %0 = arith.addi %c0_i32, %c8_i32 : i32
    %c1_i32 = arith.constant 1 : i32
    scf.for %arg7 = %c0_i32 to %0 step %c1_i32  : i32 {
      %c1_i32_8 = arith.constant 1 : i32
      %8 = arith.muli %arg7, %c1_i32_8 : i32
      %c0_i32_9 = arith.constant 0 : i32
      %9 = arith.addi %c0_i32_9, %8 : i32
      %c8_i32_10 = arith.constant 8 : i32
      %10 = arith.muli %arg0, %c8_i32_10 : i32
      %11 = arith.addi %10, %9 : i32
      %c16_i32 = arith.constant 16 : i32
      %12 = arith.muli %11, %c16_i32 : i32
      %cst_11 = arith.constant 0.000000e+00 : f32
      %13 = vector.broadcast %cst_11 : f32 to vector<1x128xf32>
      %c0_i32_12 = arith.constant 0 : i32
      %14 = arith.addi %12, %c0_i32_12 : i32
      %15 = arith.index_cast %14 : i32 to index
      %16 = memref.load %arg1[%15] : memref<128xi32, #tpu.memory_space<smem>>
      %17 = arith.index_cast %16 : i32 to index
      %c0_13 = arith.constant 0 : index
      %18 = vector.load %arg2[%17, %c0_13] : memref<64x128xf32, #tpu.memory_space<vmem>>, vector<1x128xf32>
      %19 = arith.addf %13, %18 : vector<1x128xf32>
      %c1_i32_14 = arith.constant 1 : i32
      %20 = arith.addi %12, %c1_i32_14 : i32
      %21 = arith.index_cast %20 : i32 to index
      %22 = memref.load %arg1[%21] : memref<128xi32, #tpu.memory_space<smem>>
      %23 = arith.index_cast %22 : i32 to index
      %c0_15 = arith.constant 0 : index
      %24 = vector.load %arg2[%23, %c0_15] : memref<64x128xf32, #tpu.memory_space<vmem>>, vector<1x128xf32>
      %25 = arith.addf %19, %24 : vector<1x128xf32>
      %c2_i32 = arith.constant 2 : i32
      %26 = arith.addi %12, %c2_i32 : i32
      %27 = arith.index_cast %26 : i32 to index
      %28 = memref.load %arg1[%27] : memref<128xi32, #tpu.memory_space<smem>>
      %29 = arith.index_cast %28 : i32 to index
      %c0_16 = arith.constant 0 : index
      %30 = vector.load %arg2[%29, %c0_16] : memref<64x128xf32, #tpu.memory_space<vmem>>, vector<1x128xf32>
      %31 = arith.addf %25, %30 : vector<1x128xf32>
      %c3_i32 = arith.constant 3 : i32
      %32 = arith.addi %12, %c3_i32 : i32
      %33 = arith.index_cast %32 : i32 to index
      %34 = memref.load %arg1[%33] : memref<128xi32, #tpu.memory_space<smem>>
      %35 = arith.index_cast %34 : i32 to index
      %c0_17 = arith.constant 0 : index
      %36 = vector.load %arg2[%35, %c0_17] : memref<64x128xf32, #tpu.memory_space<vmem>>, vector<1x128xf32>
      %37 = arith.addf %31, %36 : vector<1x128xf32>
      %c4_i32 = arith.constant 4 : i32
      %38 = arith.addi %12, %c4_i32 : i32
      %39 = arith.index_cast %38 : i32 to index
      %40 = memref.load %arg1[%39] : memref<128xi32, #tpu.memory_space<smem>>
      %41 = arith.index_cast %40 : i32 to index
      %c0_18 = arith.constant 0 : index
      %42 = vector.load %arg2[%41, %c0_18] : memref<64x128xf32, #tpu.memory_space<vmem>>, vector<1x128xf32>
      %43 = arith.addf %37, %42 : vector<1x128xf32>
      %c5_i32 = arith.constant 5 : i32
      %44 = arith.addi %12, %c5_i32 : i32
      %45 = arith.index_cast %44 : i32 to index
      %46 = memref.load %arg1[%45] : memref<128xi32, #tpu.memory_space<smem>>
      %47 = arith.index_cast %46 : i32 to index
      %c0_19 = arith.constant 0 : index
      %48 = vector.load %arg2[%47, %c0_19] : memref<64x128xf32, #tpu.memory_space<vmem>>, vector<1x128xf32>
      %49 = arith.addf %43, %48 : vector<1x128xf32>
      %c6_i32 = arith.constant 6 : i32
      %50 = arith.addi %12, %c6_i32 : i32
      %51 = arith.index_cast %50 : i32 to index
      %52 = memref.load %arg1[%51] : memref<128xi32, #tpu.memory_space<smem>>
      %53 = arith.index_cast %52 : i32 to index
      %c0_20 = arith.constant 0 : index
      %54 = vector.load %arg2[%53, %c0_20] : memref<64x128xf32, #tpu.memory_space<vmem>>, vector<1x128xf32>
      %55 = arith.addf %49, %54 : vector<1x128xf32>
      %c7_i32 = arith.constant 7 : i32
      %56 = arith.addi %12, %c7_i32 : i32
      %57 = arith.index_cast %56 : i32 to index
      %58 = memref.load %arg1[%57] : memref<128xi32, #tpu.memory_space<smem>>
      %59 = arith.index_cast %58 : i32 to index
      %c0_21 = arith.constant 0 : index
      %60 = vector.load %arg2[%59, %c0_21] : memref<64x128xf32, #tpu.memory_space<vmem>>, vector<1x128xf32>
      %61 = arith.addf %55, %60 : vector<1x128xf32>
      %c8_i32_22 = arith.constant 8 : i32
      %62 = arith.addi %12, %c8_i32_22 : i32
      %63 = arith.index_cast %62 : i32 to index
      %64 = memref.load %arg1[%63] : memref<128xi32, #tpu.memory_space<smem>>
      %65 = arith.index_cast %64 : i32 to index
      %c0_23 = arith.constant 0 : index
      %66 = vector.load %arg2[%65, %c0_23] : memref<64x128xf32, #tpu.memory_space<vmem>>, vector<1x128xf32>
      %67 = arith.addf %61, %66 : vector<1x128xf32>
      %c9_i32 = arith.constant 9 : i32
      %68 = arith.addi %12, %c9_i32 : i32
      %69 = arith.index_cast %68 : i32 to index
      %70 = memref.load %arg1[%69] : memref<128xi32, #tpu.memory_space<smem>>
      %71 = arith.index_cast %70 : i32 to index
      %c0_24 = arith.constant 0 : index
      %72 = vector.load %arg2[%71, %c0_24] : memref<64x128xf32, #tpu.memory_space<vmem>>, vector<1x128xf32>
      %73 = arith.addf %67, %72 : vector<1x128xf32>
      %c10_i32 = arith.constant 10 : i32
      %74 = arith.addi %12, %c10_i32 : i32
      %75 = arith.index_cast %74 : i32 to index
      %76 = memref.load %arg1[%75] : memref<128xi32, #tpu.memory_space<smem>>
      %77 = arith.index_cast %76 : i32 to index
      %c0_25 = arith.constant 0 : index
      %78 = vector.load %arg2[%77, %c0_25] : memref<64x128xf32, #tpu.memory_space<vmem>>, vector<1x128xf32>
      %79 = arith.addf %73, %78 : vector<1x128xf32>
      %c11_i32 = arith.constant 11 : i32
      %80 = arith.addi %12, %c11_i32 : i32
      %81 = arith.index_cast %80 : i32 to index
      %82 = memref.load %arg1[%81] : memref<128xi32, #tpu.memory_space<smem>>
      %83 = arith.index_cast %82 : i32 to index
      %c0_26 = arith.constant 0 : index
      %84 = vector.load %arg2[%83, %c0_26] : memref<64x128xf32, #tpu.memory_space<vmem>>, vector<1x128xf32>
      %85 = arith.addf %79, %84 : vector<1x128xf32>
      %c12_i32 = arith.constant 12 : i32
      %86 = arith.addi %12, %c12_i32 : i32
      %87 = arith.index_cast %86 : i32 to index
      %88 = memref.load %arg1[%87] : memref<128xi32, #tpu.memory_space<smem>>
      %89 = arith.index_cast %88 : i32 to index
      %c0_27 = arith.constant 0 : index
      %90 = vector.load %arg2[%89, %c0_27] : memref<64x128xf32, #tpu.memory_space<vmem>>, vector<1x128xf32>
      %91 = arith.addf %85, %90 : vector<1x128xf32>
      %c13_i32 = arith.constant 13 : i32
      %92 = arith.addi %12, %c13_i32 : i32
      %93 = arith.index_cast %92 : i32 to index
      %94 = memref.load %arg1[%93] : memref<128xi32, #tpu.memory_space<smem>>
      %95 = arith.index_cast %94 : i32 to index
      %c0_28 = arith.constant 0 : index
      %96 = vector.load %arg2[%95, %c0_28] : memref<64x128xf32, #tpu.memory_space<vmem>>, vector<1x128xf32>
      %97 = arith.addf %91, %96 : vector<1x128xf32>
      %c14_i32 = arith.constant 14 : i32
      %98 = arith.addi %12, %c14_i32 : i32
      %99 = arith.index_cast %98 : i32 to index
      %100 = memref.load %arg1[%99] : memref<128xi32, #tpu.memory_space<smem>>
      %101 = arith.index_cast %100 : i32 to index
      %c0_29 = arith.constant 0 : index
      %102 = vector.load %arg2[%101, %c0_29] : memref<64x128xf32, #tpu.memory_space<vmem>>, vector<1x128xf32>
      %103 = arith.addf %97, %102 : vector<1x128xf32>
      %c15_i32 = arith.constant 15 : i32
      %104 = arith.addi %12, %c15_i32 : i32
      %105 = arith.index_cast %104 : i32 to index
      %106 = memref.load %arg1[%105] : memref<128xi32, #tpu.memory_space<smem>>
      %107 = arith.index_cast %106 : i32 to index
      %c0_30 = arith.constant 0 : index
      %108 = vector.load %arg2[%107, %c0_30] : memref<64x128xf32, #tpu.memory_space<vmem>>, vector<1x128xf32>
      %109 = arith.addf %103, %108 : vector<1x128xf32>
      %c16_i32_31 = arith.constant 16 : i32
      %cst_32 = arith.constant 6.250000e-02 : f32
      %110 = vector.broadcast %cst_32 : f32 to vector<1x128xf32>
      %111 = arith.mulf %109, %110 : vector<1x128xf32>
      %112 = arith.index_cast %9 : i32 to index
      %c0_33 = arith.constant 0 : index
      %113 = vector.load %arg6[%112, %c0_33] : memref<8x128xf32, #tpu.memory_space<vmem>>, vector<1x128xf32>
      tpu.vector_store %arg6[%112, %c0_33], %111 {strides = array<i32>} : memref<8x128xf32, #tpu.memory_space<vmem>>, vector<1x128xf32>,
    }
    %c8_i32_0 = arith.constant 8 : i32
    %c0 = arith.constant 0 : index
    %c0_1 = arith.constant 0 : index
    %1 = vector.load %arg6[%c0, %c0_1] : memref<8x128xf32, #tpu.memory_space<vmem>>, vector<8x128xf32>
    %c0_2 = arith.constant 0 : index
    %c0_3 = arith.constant 0 : index
    %2 = vector.load %arg3[%c0_2, %c0_3] : memref<128x128xf32, #tpu.memory_space<vmem>>, vector<128x128xf32>
    %cst = arith.constant dense<0.000000e+00> : vector<8x128xf32>
    %3 = tpu.matmul %1, %2, %cst {dimension_numbers = #tpu.dot_dimension_numbers<[1], [0], [0], [1], [0, 0, 1, 1], [], []>} : vector<8x128xf32>, vector<128x128xf32>, vector<8x128xf32> -> vector<8x128xf32>
    %c0_4 = arith.constant 0 : index
    %c0_5 = arith.constant 0 : index
    %4 = vector.load %arg4[%c0_4, %c0_5] : memref<1x128xf32, #tpu.memory_space<vmem>>, vector<1x128xf32>
    %5 = vector.broadcast %4 : vector<1x128xf32> to vector<8x128xf32>
    %6 = arith.addf %3, %5 : vector<8x128xf32>
    %c0_6 = arith.constant 0 : index
    %c0_7 = arith.constant 0 : index
    %7 = vector.load %arg5[%c0_6, %c0_7] : memref<8x128xf32, #tpu.memory_space<vmem>>, vector<8x128xf32>
    tpu.vector_store %arg5[%c0_6, %c0_7], %6 {strides = array<i32>} : memref<8x128xf32, #tpu.memory_space<vmem>>, vector<8x128xf32>,
    return
  }
  func.func @transform_0(%arg0: i32, %arg1: memref<128xi32, #tpu.memory_space<smem>>) -> (i32, i32) {
    %c0_i32 = arith.constant 0 : i32
    %c0_i32_0 = arith.constant 0 : i32
    %c0_i32_1 = arith.constant 0 : i32
    return %c0_i32, %c0_i32_0 : i32, i32
  }
  func.func @transform_1(%arg0: i32, %arg1: memref<128xi32, #tpu.memory_space<smem>>) -> (i32, i32) {
    %c0_i32 = arith.constant 0 : i32
    %c0_i32_0 = arith.constant 0 : i32
    %c0_i32_1 = arith.constant 0 : i32
    return %c0_i32, %c0_i32_0 : i32, i32
  }
  func.func @transform_2(%arg0: i32, %arg1: memref<128xi32, #tpu.memory_space<smem>>) -> (i32, i32) {
    %c0_i32 = arith.constant 0 : i32
    %c0_i32_0 = arith.constant 0 : i32
    %c0_i32_1 = arith.constant 0 : i32
    return %c0_i32, %c0_i32_0 : i32, i32
  }
  func.func @transform_3(%arg0: i32, %arg1: memref<128xi32, #tpu.memory_space<smem>>) -> (i32, i32) {
    %c0_i32 = arith.constant 0 : i32
    %c0_i32_0 = arith.constant 0 : i32
    return %arg0, %c0_i32 : i32, i32
  }
}

</mosaic_0001>

<llo_original>
// kernel: tpu_custom_call.1
$region0: #{tpu_custom_call.1}
  #allocation0 [shape = 'u32[]', space=smem, size = 0x4, offset = 0x4, fixed_abs, tag = 'smem constant byte address 0x4 - core index']
  #allocation1 [shape = 'u32[72,128]{1,0:T(1,128)}', space=vmem, size = 0x9000, scoped, tag = 'internal scratch']
  #allocation2 [shape = 'f32[8,128]{1,0:T(8,128)}', space=vmem, size = 0x1000, scoped, tag = 'scratch operand']
  #allocation3 [shape = 's32[1]{0}', space=sflag, size = 0x4, scoped, tag = 'scoped memory for tpu_custom_call.1']
  #allocation4 [shape = 'u8[512]{0}', space=smem, size = 0x200, scoped, tag = 'prefetched SMEM operand 0']
  %s0 = inlined_call_operand.hbm [shape: s32[128], index: 0, kind: input, shape index: {}]
  %s1 = inlined_call_operand.hbm [shape: f32[64,128], index: 1, kind: input, shape index: {}]
  %s2 = inlined_call_operand.hbm [shape: f32[128,128], index: 2, kind: input, shape index: {}]
  %s3 = inlined_call_operand.vmem [shape: f32[1,128], index: 3, kind: input, shape index: {}]
  %s4 = inlined_call_operand.hbm [shape: f32[8,128], index: 4, kind: output, shape index: {}]
  %s5 = sld [smem:[#allocation0]]
  $region37: #{tpu_custom_call.1} parent=0
    _
  %s7 = ssub.s32 1, %s5
  %s8 = scalar_select 0, %s7, %s5
  %s10 = sshll.u32 %s0, 4
  %s11 = int_to_ptr.hbm [resolvable:$true] %s10
  %13 = dma.hbm_to_smem %s11, 16, [#allocation4], [#allocation3]
  %15 = dma.done [#allocation3], 16
  %16 = sfence
  $region1: #{tpu_custom_call.1} parent=0
    #allocation5 [shape = 'u8[32768]{0}', space=vmem, size = 0x8000, scoped, tag = 'input window, operand 1, single buffered']
    #allocation6 [shape = 's32[1]{0}', space=sflag, size = 0x4, scoped, tag = 'scoped memory for tpu_custom_call.1']
    #allocation7 [shape = 's32[1]{0}', space=sflag, size = 0x4, scoped, tag = 'scoped memory for tpu_custom_call.1']
    #allocation8 [shape = 'u8[65536]{0}', space=vmem, size = 0x10000, scoped, tag = 'input window, operand 2, single buffered']
    #allocation9 [shape = 's32[1]{0}', space=sflag, size = 0x4, scoped, tag = 'scoped memory for tpu_custom_call.1']
    #allocation10 [shape = 'u8[4096]{0}', space=vmem, size = 0x1000, scoped, tag = 'output window, operand 0, single buffered']
    %17 = vsyncpa [#allocation6], 0
    %18 = vsyncpa [#allocation9], 0
    %19 = vsyncpa [#allocation7], 0
    // Predicated region
    $region2: #{tpu_custom_call.1} parent=1 // pred_check
      _
    $region3: #{tpu_custom_call.1} parent=1 // pred_check_branch
      %21 = sbr.rel (0) target = $region5
    $region4: #{tpu_custom_call.1} parent=1 // pred_region
      %23 = vsyncadd [#allocation6], 0
      %s24 = sshll.u32 %s1, 4
      %s25 = int_to_ptr.hbm [resolvable:$true] %s24
      %s26 = sshll.u32 [#allocation5], 4
      %s27 = int_to_ptr.vmem [resolvable:$true] %s26
      %32 = dma.hbm_to_vmem [thread:$0]  %s25, 1024, %s27, [#allocation6], 128, 128, 8
    $region5: #{tpu_custom_call.1} parent=1 // pred_fallthru
      _
    // Predicated region
    $region6: #{tpu_custom_call.1} parent=1 // pred_check
      _
    $region7: #{tpu_custom_call.1} parent=1 // pred_check_branch
      %34 = sbr.rel (0) target = $region9
    $region8: #{tpu_custom_call.1} parent=1 // pred_region
      %36 = vsyncadd [#allocation9], 0
      %s37 = sshll.u32 %s2, 4
      %s38 = int_to_ptr.hbm [resolvable:$true] %s37
      %s39 = sshll.u32 [#allocation8], 4
      %s40 = int_to_ptr.vmem [resolvable:$true] %s39
      %45 = dma.hbm_to_vmem [thread:$0]  %s38, 2048, %s40, [#allocation9], 128, 128, 8
    $region9: #{tpu_custom_call.1} parent=1 // pred_fallthru
      _
    // Predicated region
    $region10: #{tpu_custom_call.1} parent=1 // pred_check
      _
    $region11: #{tpu_custom_call.1} parent=1 // pred_check_branch
      %47 = sbr.rel (0) target = $region13
    $region12: #{tpu_custom_call.1} parent=1 // pred_region
      _
    $region13: #{tpu_custom_call.1} parent=1 // pred_fallthru
      _
    // Predicated region
    $region14: #{tpu_custom_call.1} parent=1 // pred_check
      _
    $region15: #{tpu_custom_call.1} parent=1 // pred_check_branch
      %49 = sbr.rel (0) target = $region17
    $region16: #{tpu_custom_call.1} parent=1 // pred_region
      %51 = dma.done [#allocation6], 1024
    $region17: #{tpu_custom_call.1} parent=1 // pred_fallthru
      _
    // Predicated region
    $region18: #{tpu_custom_call.1} parent=1 // pred_check
      _
    $region19: #{tpu_custom_call.1} parent=1 // pred_check_branch
      %53 = sbr.rel (0) target = $region21
    $region20: #{tpu_custom_call.1} parent=1 // pred_region
      %55 = dma.done [#allocation9], 2048
    $region21: #{tpu_custom_call.1} parent=1 // pred_fallthru
      _
    loop: start=0, step=1, limit=8
    $region22: #{tpu_custom_call.1} parent=1 // loop_pre_header
      _
    $region23: #{tpu_custom_call.1} parent=1 // loop_header
      %s57 = sphi 0, %s61
      %p58 = scmp.ge.s32.totalorder %s57, 8
    $region24: #{tpu_custom_call.1} parent=1 // loop_header_branch
      %60 = sbr.rel (%p58) target = $region28
    $region25: #{tpu_custom_call.1} parent=1 // loop_body
      %s62 = smul.u32 0, 8
      %s63 = sadd.s32 %s62, %s57
      %s64 = smul.u32 %s63, 16
      %s65 = sld [smem:[#allocation4 + %s64]]
      %s66 = scalar_lea.vmem [#allocation5], %s65
      %v67 = vld [vmem:[%s66] sm:$0x1]
      %v68 = vadd.f32 %v67, 0.0
      %s69 = sadd.s32 %s64, 1
      %s70 = sld [smem:[#allocation4 + %s69]]
      %s71 = scalar_lea.vmem [#allocation5], %s70
      %v72 = vld [vmem:[%s71] sm:$0x1]
      %v73 = vadd.f32 %v68, %v72
      %s74 = sadd.s32 %s64, 2
      %s75 = sld [smem:[#allocation4 + %s74]]
      %s76 = scalar_lea.vmem [#allocation5], %s75
      %v77 = vld [vmem:[%s76] sm:$0x1]
      %v78 = vadd.f32 %v73, %v77
      %s79 = sadd.s32 %s64, 3
      %s80 = sld [smem:[#allocation4 + %s79]]
      %s81 = scalar_lea.vmem [#allocation5], %s80
      %v82 = vld [vmem:[%s81] sm:$0x1]
      %v83 = vadd.f32 %v78, %v82
      %s84 = sadd.s32 %s64, 4
      %s85 = sld [smem:[#allocation4 + %s84]]
      %s86 = scalar_lea.vmem [#allocation5], %s85
      %v87 = vld [vmem:[%s86] sm:$0x1]
      %v88 = vadd.f32 %v83, %v87
      %s89 = sadd.s32 %s64, 5
      %s90 = sld [smem:[#allocation4 + %s89]]
      %s91 = scalar_lea.vmem [#allocation5], %s90
      %v92 = vld [vmem:[%s91] sm:$0x1]
      %v93 = vadd.f32 %v88, %v92
      %s94 = sadd.s32 %s64, 6
      %s95 = sld [smem:[#allocation4 + %s94]]
      %s96 = scalar_lea.vmem [#allocation5], %s95
      %v97 = vld [vmem:[%s96] sm:$0x1]
      %v98 = vadd.f32 %v93, %v97
      %s99 = sadd.s32 %s64, 7
      %s100 = sld [smem:[#allocation4 + %s99]]
      %s101 = scalar_lea.vmem [#allocation5], %s100
      %v102 = vld [vmem:[%s101] sm:$0x1]
      %v103 = vadd.f32 %v98, %v102
      %s104 = sadd.s32 %s64, 8
      %s105 = sld [smem:[#allocation4 + %s104]]
      %s106 = scalar_lea.vmem [#allocation5], %s105
      %v107 = vld [vmem:[%s106] sm:$0x1]
      %v108 = vadd.f32 %v103, %v107
      %s109 = sadd.s32 %s64, 9
      %s110 = sld [smem:[#allocation4 + %s109]]
      %s111 = scalar_lea.vmem [#allocation5], %s110
      %v112 = vld [vmem:[%s111] sm:$0x1]
      %v113 = vadd.f32 %v108, %v112
      %s114 = sadd.s32 %s64, 10
      %s115 = sld [smem:[#allocation4 + %s114]]
      %s116 = scalar_lea.vmem [#allocation5], %s115
      %v117 = vld [vmem:[%s116] sm:$0x1]
      %v118 = vadd.f32 %v113, %v117
      %s119 = sadd.s32 %s64, 11
      %s120 = sld [smem:[#allocation4 + %s119]]
      %s121 = scalar_lea.vmem [#allocation5], %s120
      %v122 = vld [vmem:[%s121] sm:$0x1]
      %v123 = vadd.f32 %v118, %v122
      %s124 = sadd.s32 %s64, 12
      %s125 = sld [smem:[#allocation4 + %s124]]
      %s126 = scalar_lea.vmem [#allocation5], %s125
      %v127 = vld [vmem:[%s126] sm:$0x1]
      %v128 = vadd.f32 %v123, %v127
      %s129 = sadd.s32 %s64, 13
      %s130 = sld [smem:[#allocation4 + %s129]]
      %s131 = scalar_lea.vmem [#allocation5], %s130
      %v132 = vld [vmem:[%s131] sm:$0x1]
      %v133 = vadd.f32 %v128, %v132
      %s134 = sadd.s32 %s64, 14
      %s135 = sld [smem:[#allocation4 + %s134]]
      %s136 = scalar_lea.vmem [#allocation5], %s135
      %v137 = vld [vmem:[%s136] sm:$0x1]
      %v138 = vadd.f32 %v133, %v137
      %s139 = sadd.s32 %s64, 15
      %s140 = sld [smem:[#allocation4 + %s139]]
      %s141 = scalar_lea.vmem [#allocation5], %s140
      %v142 = vld [vmem:[%s141] sm:$0x1]
      %v143 = vadd.f32 %v138, %v142
      %v144 = vmul.f32 %v143, 0.0625
      %s145 = scalar_lea.vmem [#allocation2], %s57
      %146 = vst [vmem:[%s145] sm:$0x1] %v144
    $region26: #{tpu_custom_call.1} parent=1 // loop_footer
      %s61 = sadd.s32 1, %s57
    $region27: #{tpu_custom_call.1} parent=1 // loop_footer_branch
      %56 = sbr.rel target = $region23
    $region28: #{tpu_custom_call.1} parent=1 // loop_exit
      _
    %v147 = vld [vmem:[#allocation2] sm:$0xff]
    %v148 = vld [vmem:[#allocation8] sm:$0xff]
    %v149 = vld [vmem:[#allocation8 + $0x8] sm:$0xff]
    %v150 = vld [vmem:[#allocation8 + $0x10] sm:$0xff]
    %v151 = vld [vmem:[#allocation8 + $0x18] sm:$0xff]
    %v152 = vld [vmem:[#allocation8 + $0x20] sm:$0xff]
    %v153 = vld [vmem:[#allocation8 + $0x28] sm:$0xff]
    %v154 = vld [vmem:[#allocation8 + $0x30] sm:$0xff]
    %v155 = vld [vmem:[#allocation8 + $0x38] sm:$0xff]
    %v156 = vld [vmem:[#allocation8 + $0x40] sm:$0xff]
    %v157 = vld [vmem:[#allocation8 + $0x48] sm:$0xff]
    %v158 = vld [vmem:[#allocation8 + $0x50] sm:$0xff]
    %v159 = vld [vmem:[#allocation8 + $0x58] sm:$0xff]
    %v160 = vld [vmem:[#allocation8 + $0x60] sm:$0xff]
    %v161 = vld [vmem:[#allocation8 + $0x68] sm:$0xff]
    %v162 = vld [vmem:[#allocation8 + $0x70] sm:$0xff]
    %v163 = vld [vmem:[#allocation8 + $0x78] sm:$0xff]
    %v164 = vld [vmem:[%s3] sm:$0x1]
    %v166 = vperm.slane %v164, 0
    %168 = vmatpush.msra.mxu0 %v163
    %169 = vmatpush.msra.mxu0 %v162
    %170 = vmatpush.msra.mxu0 %v161
    %171 = vmatpush.msra.mxu0 %v160
    %172 = vmatpush.msra.mxu0 %v159
    %173 = vmatpush.msra.mxu0 %v158
    %174 = vmatpush.msra.mxu0 %v157
    %175 = vmatpush.msra.mxu0 %v156
    %176 = vmatpush.msra.mxu0 %v155
    %177 = vmatpush.msra.mxu0 %v154
    %178 = vmatpush.msra.mxu0 %v153
    %179 = vmatpush.msra.mxu0 %v152
    %180 = vmatpush.msra.mxu0 %v151
    %181 = vmatpush.msra.mxu0 %v150
    %182 = vmatpush.msra.mxu0 %v149
    %183 = vmatpush.msra.mxu0 %v148
    %184 = vmatmul.f32.gmra.mxu0 %v147
    %v185 = vpop.f32.mrf.mxu0
    %v186 = vadd.f32 %v166, %v185
    %187 = vdwg.mxu0
    %188 = vst [vmem:[#allocation10] sm:$0xff] %v186
    // Predicated region
    $region29: #{tpu_custom_call.1} parent=1 // pred_check
      _
    $region30: #{tpu_custom_call.1} parent=1 // pred_check_branch
      %190 = sbr.rel (0) target = $region32
    $region31: #{tpu_custom_call.1} parent=1 // pred_region
      %192 = vsyncadd [#allocation7], 0
      %s194 = sshll.u32 [#allocation10], 4
      %s195 = int_to_ptr.vmem [resolvable:$true] %s194
      %s196 = sshll.u32 %s4, 4
      %s197 = int_to_ptr.hbm [resolvable:$true] %s196
      %199 = dma.vmem_to_hbm [thread:$0]  %s195, 128, %s197, [#allocation7]
    $region32: #{tpu_custom_call.1} parent=1 // pred_fallthru
      _
    // Predicated region
    $region33: #{tpu_custom_call.1} parent=1 // pred_check
      _
    $region34: #{tpu_custom_call.1} parent=1 // pred_check_branch
      %201 = sbr.rel (0) target = $region36
    $region35: #{tpu_custom_call.1} parent=1 // pred_region
      %203 = dma.done [#allocation7], 128
    $region36: #{tpu_custom_call.1} parent=1 // pred_fallthru
      _
    %204 = vsyncpa [#allocation6], 1
    %205 = vsyncpa [#allocation9], 1
    %206 = vsyncpa [#allocation7], 1

</llo_original>
